<compile_context>
chip_gen: v5e
topology: v5e:2x2
jax: 0.10.0
libtpu: 0.0.40
codegen_flags: <defaults>
</compile_context>

<pallas_src>
import functools

import jax
import jax.numpy as jnp
from jax.experimental import pallas as pl
from jax.experimental.pallas import tpu as pltpu

LANE = 128
# Minimum packed sublane rows per itemsize (f32 -> 8, bf16 -> 16, int8/fp8 -> 32).
_SUBLANE_MIN = {4: 8, 2: 16, 1: 32}
# ~2 MiB per block: with double-buffered in+out (4 buffers) that is ~8 MiB VMEM,
# comfortably inside the default scoped limits on v5e (16 MiB) / v6e / v7x (32 MiB),
# while large enough to sit near HBM roofline (>=85% measured for >=1 MiB tiles).
_TARGET_BLOCK_BYTES = 2 * 1024 * 1024


def _copy_kernel(x_ref, o_ref):
    # Identity copy of the current VMEM tile (the whole "compute" of a view).
    o_ref[...] = x_ref[...]


def _round_up(x, m):
    return ((x + m - 1) // m) * m


def _resolve_size(total, size):
    """Resolve a torch-style size tuple (may contain one -1)."""
    size = tuple(int(s) for s in size)
    if -1 in size:
        known = 1
        for s in size:
            if s != -1:
                known *= s
        assert known > 0 and total % known == 0, (
            "view size incompatible with number of elements")
        size = tuple(total // known if s == -1 else s for s in size)
    prod = 1
    for s in size:
        prod *= s
    assert prod == total, "view size incompatible with number of elements"
    return size


def pallas_view(tensor, size, materialize=True):
    """Equivalent of torch.Tensor.view(size).

    materialize=False returns the metadata-only reshape (the true torch.view
    semantics, zero HBM traffic).  materialize=True streams the bytes through
    a Pallas identity-copy kernel.
    """
    total = int(tensor.size)
    out_size = _resolve_size(total, size)

    if not materialize or total == 0:
        return jnp.reshape(tensor, out_size)

    dtype = tensor.dtype
    itemsize = jnp.dtype(dtype).itemsize
    sub_min = _SUBLANE_MIN.get(itemsize, 8)

    # Tile sizing: lane-dense (tile_rows, 128) blocks, tile_rows a multiple of
    # the dtype's packed sublane minimum, targeting ~_TARGET_BLOCK_BYTES/step.
    rows_needed = pl.cdiv(total, LANE)
    target_rows = max(sub_min, _TARGET_BLOCK_BYTES // (LANE * itemsize))
    tile_rows = min(_round_up(target_rows, sub_min),
                    _round_up(rows_needed, sub_min))
    padded_rows = _round_up(rows_needed, tile_rows)
    padded_total = padded_rows * LANE

    # Row-major flatten (glue) + pad so the grid divides evenly (no giant
    # whole-array fallback, no masked last tile).
    flat = jnp.reshape(tensor, (total,))
    if padded_total != total:
        flat = jnp.pad(flat, (0, padded_total - total))
    x2d = jnp.reshape(flat, (padded_rows, LANE))

    grid = (padded_rows // tile_rows,)
    out2d = pl.pallas_call(
        _copy_kernel,
        out_shape=jax.ShapeDtypeStruct((padded_rows, LANE), dtype),
        grid_spec=pltpu.PrefetchScalarGridSpec(
            num_scalar_prefetch=0,
            grid=grid,
            in_specs=[pl.BlockSpec((tile_rows, LANE), lambda i: (i, 0))],
            out_specs=pl.BlockSpec((tile_rows, LANE), lambda i: (i, 0)),
        ),
        compiler_params=pltpu.CompilerParams(
            # Independent tiles -> parallel: shards across v7x's 2 TensorCores,
            # neutral on single-core v5e/v6e.
            dimension_semantics=("parallel",),
            vmem_limit_bytes=32 * 1024 * 1024,
        ),
        cost_estimate=pl.CostEstimate(
            flops=0,
            transcendentals=0,
            bytes_accessed=2 * padded_total * itemsize,
        ),
        # Pure copy: let XLA reuse the input HBM buffer for the output.
        input_output_aliases={0: 0},
    )(x2d)

    flat_out = jnp.reshape(out2d, (padded_total,))
    if padded_total != total:
        flat_out = flat_out[:total]
    return jnp.reshape(flat_out, out_size)  # the "view" itself (glue)


if __name__ == "__main__":
    key = jax.random.PRNGKey(0)
    # Input consistent with an NCHW feature map; View flattens spatial+channel.
    x = jax.random.normal(key, (2, 4, 16, 16), dtype=jnp.float32)
    size = (2, -1)  # View((2, -1)) -> (2, 1024)

    view_fn = jax.jit(functools.partial(pallas_view, size=size))
    y = view_fn(x)
    y = jax.block_until_ready(y)

    # Verify against plain reshape (torch.view semantics on contiguous input).
    ref = jnp.reshape(x, (2, 1024))
    assert y.shape == (2, 1024)
    assert y.dtype == x.dtype
    assert bool(jnp.array_equal(y, ref))

    # Also exercise an unaligned size (previous version fell back to a
    # whole-array VMEM block here; now it takes the padded tiled path).
    x2 = jax.random.normal(jax.random.PRNGKey(1), (3, 5, 7), dtype=jnp.float32)
    y2 = jax.block_until_ready(
        jax.jit(functools.partial(pallas_view, size=(-1,)))(x2))
    assert bool(jnp.array_equal(y2, jnp.reshape(x2, (105,))))

    print("KERNEL_OK")
</pallas_src>

<mosaic_0001>
module attributes {stable_mosaic.version = 11 : i64} {
  func.func @_copy_kernel(%arg0: i32, %arg1: memref<16x128xf32, #tpu.memory_space<vmem>>, %arg2: memref<16x128xf32, #tpu.memory_space<vmem>>) attributes {dimension_semantics = [#tpu.dimension_semantics<parallel>], iteration_bounds = array<i64: 1>, scalar_prefetch = 0 : i64, scratch_operands = 0 : i64, tpu.core_type = #tpu.core_type<tc>, window_params = [{transform_indices = @transform_0, window_bounds = array<i64: 16, 128>}, {transform_indices = @transform_1, window_bounds = array<i64: 16, 128>}]} {
    %c0 = arith.constant 0 : index
    %c0_0 = arith.constant 0 : index
    %0 = vector.load %arg1[%c0, %c0_0] : memref<16x128xf32, #tpu.memory_space<vmem>>, vector<16x128xf32>
    %c0_1 = arith.constant 0 : index
    %c0_2 = arith.constant 0 : index
    %1 = vector.load %arg2[%c0_1, %c0_2] : memref<16x128xf32, #tpu.memory_space<vmem>>, vector<16x128xf32>
    tpu.vector_store %arg2[%c0_1, %c0_2], %0 {strides = array<i32>} : memref<16x128xf32, #tpu.memory_space<vmem>>, vector<16x128xf32>,
    return
  }
  func.func @transform_0(%arg0: i32) -> (i32, i32) {
    %c0_i32 = arith.constant 0 : i32
    %c0_i32_0 = arith.constant 0 : i32
    return %arg0, %c0_i32 : i32, i32
  }
  func.func @transform_1(%arg0: i32) -> (i32, i32) {
    %c0_i32 = arith.constant 0 : i32
    %c0_i32_0 = arith.constant 0 : i32
    return %arg0, %c0_i32 : i32, i32
  }
}

</mosaic_0001>

<llo_original>
// kernel: pallas_view.1
$region0: #{pallas_view.1}
  #allocation0 [shape = 'u32[]', space=smem, size = 0x4, offset = 0x4, fixed_abs, tag = 'smem constant byte address 0x4 - core index']
  #allocation1 [shape = 'u32[72,128]{1,0:T(1,128)}', space=vmem, size = 0x9000, scoped, tag = 'internal scratch']
  %s0 = inlined_call_operand.vmem [shape: f32[16,128], index: 0, kind: input, shape index: {}, may-alias: {0,1}]
  %s1 = inlined_call_operand.vmem [shape: f32[16,128], index: 1, kind: output, shape index: {}, may-alias: {0,1}]
  %s2 = sld [smem:[#allocation0]]
  $region14: #{pallas_view.1} parent=0
    _
  %s4 = ssub.s32 1, %s2
  %s5 = scalar_select 0, %s4, %s2
  // Predicated region
  $region2: #{pallas_view.1} parent=0 // pred_check
    _
  $region3: #{pallas_view.1} parent=0 // pred_check_branch
    %7 = sbr.rel (0) target = $region5
  $region4: #{pallas_view.1} parent=0 // pred_region
    _
  $region5: #{pallas_view.1} parent=0 // pred_fallthru
    _
  %v8 = vld [vmem:[%s0] sm:$0xff]
  %v9 = vld [vmem:[%s0 + $0x8] sm:$0xff]
  %10 = vst [vmem:[%s1] sm:$0xff] %v8
  %11 = vst [vmem:[%s1 + $0x8] sm:$0xff] %v9
  // Predicated region
  $region6: #{pallas_view.1} parent=0 // pred_check
    _
  $region7: #{pallas_view.1} parent=0 // pred_check_branch
    %13 = sbr.rel (0) target = $region9
  $region8: #{pallas_view.1} parent=0 // pred_region
    _
  $region9: #{pallas_view.1} parent=0 // pred_fallthru
    _
  // Predicated region
  $region10: #{pallas_view.1} parent=0 // pred_check
    _
  $region11: #{pallas_view.1} parent=0 // pred_check_branch
    %15 = sbr.rel (0) target = $region13
  $region12: #{pallas_view.1} parent=0 // pred_region
    _
  $region13: #{pallas_view.1} parent=0 // pred_fallthru
    _

</llo_original>
